<compile_context>
chip_gen: v6e
topology: v6e:2x2x1
jax: 0.10.0
libtpu: 0.0.40
codegen_flags: <defaults>
</compile_context>

<pallas_src>
import jax
import jax.numpy as jnp
from jax.experimental import pallas as pl
from jax.experimental.pallas import tpu as pltpu

# ---------------- problem sizes ----------------
N      = 16              # number of nodes (2 graphs x 8 nodes)
B      = 2               # number of graphs
B_PAD  = 8               # padded graph count (sublane multiple)
HIDDEN = 32              # GAT hidden size
HEADS  = 4               # GAT1 heads
HC     = HIDDEN * HEADS  # 128
HN     = HEADS * N       # 64  (lane-dense per-head source axis)
NEG_SLOPE = 0.2          # PyG GATConv LeakyReLU default
NEG_INF   = -1e9
BF = jnp.bfloat16


def ring_risk_kernel(xc_ref, x64_ref, st_ref, w1s_ref, w2c_ref, prm_ref, out_ref):
    # xc_ref : [N, 1]    node features (column)
    # x64_ref: [1, HN]   node features tiled HEADS times along lanes (x[j] at h*N+j)
    # st_ref : [N+B_PAD, HN]  rows 0:N = mask tiled per head, rows N: = pool matrix
    # w1s_ref: [2*HN, HC] bf16: rows 0:HN = block-diag w1 band, rows HN: = head indicator
    # w2c_ref: [HC, HIDDEN+2] bf16: [w2 | w2 @ a2]
    # prm_ref: [8, HC] f32 packed small params (see pack_params)
    x_col = xc_ref[...]                                     # [N, 1]
    x64   = x64_ref[...]                                    # [1, HN]
    mask4 = st_ref[0:N, :]                                  # [N, HN]
    mask  = mask4[:, 0:N]                                   # [N, N]
    pool  = st_ref[N:N + B_PAD, 0:N]                        # [B_PAD, N]

    cd64 = prm_ref[0:1, 0:HN]                               # [1, HN]  c_dst[h] at h*N+j
    cs64 = prm_ref[1:2, 0:HN]                               # [1, HN]  c_src[h] at h*N+j
    b1   = prm_ref[2:3, :]                                  # [1, HC]
    b2   = prm_ref[3:4, 0:HIDDEN]                           # [1, HIDDEN]
    wlin = prm_ref[4:5, 0:HIDDEN]                           # [1, HIDDEN]
    blin = prm_ref[5:6, 0:1]                                # [1, 1]

    w1band = w1s_ref[0:HN, :]                               # [HN, HC] bf16
    ind64  = w1s_ref[HN:2 * HN, :]                          # [HN, HC] bf16

    # ---------------- GAT layer 1 (heads=4, concat) ----------------
    # Rank-1 fold: score[i, h*N+j] = LeakyReLU(c_dst[h]*x[i] + c_src[h]*x[j]) + mask[i,j]
    s1 = x_col * cd64 + cs64 * x64                          # [N, HN]  (pure VPU)
    s1 = jnp.maximum(s1, NEG_SLOPE * s1) + mask4            # LeakyReLU(0.2) + edge mask
    # Per-row (all-heads) max shift: constant per (i) so every per-head softmax
    # is unchanged; keeps exp() stable and cancels exactly in num/den below.
    s1 = s1 - jnp.max(s1, axis=-1, keepdims=True)
    e1 = jnp.exp(s1)                                        # masked entries underflow to 0

    # Deferred softmax normalization; both dots share the same lhs layout.
    num = jnp.dot((e1 * x64).astype(BF), w1band,
                  preferred_element_type=jnp.float32)       # [N, HC]
    den = jnp.dot(e1.astype(BF), ind64,
                  preferred_element_type=jnp.float32)       # [N, HC]
    x1 = jnp.maximum(num * pl.reciprocal(den, approx=True) + b1, 0.0)   # [N, HC]

    # ---------------- GAT layer 2 (heads=1) ----------------
    x1w = jnp.dot(x1.astype(BF), w2c_ref[...],
                  preferred_element_type=jnp.float32)       # [N, HIDDEN+2]
    xsrc2 = x1w[:, 0:HIDDEN]                                # [N, HIDDEN]
    ab2   = x1w[:, HIDDEN:HIDDEN + 2]                       # [N, 2]  col0 = dst, col1 = src
    s2 = ab2[:, 0:1] + ab2[:, 1:2].T                        # [N, N]
    s2 = jnp.maximum(s2, NEG_SLOPE * s2) + mask
    s2 = s2 - jnp.max(s2, axis=-1, keepdims=True)
    p2 = jnp.exp(s2)
    p2 = p2 * pl.reciprocal(jnp.sum(p2, axis=-1, keepdims=True), approx=True)
    x2 = jnp.dot(p2.astype(BF), xsrc2.astype(BF),
                 preferred_element_type=jnp.float32) + b2
    x2 = jnp.maximum(x2, 0.0)                               # [N, HIDDEN]

    # ---------------- global_mean_pool + Linear + sigmoid ----------------
    pooled = jnp.dot(pool.astype(BF), x2.astype(BF),
                     preferred_element_type=jnp.float32)    # [B_PAD, HIDDEN]
    logit = jnp.sum(pooled * wlin, axis=-1, keepdims=True) + blin        # [B_PAD, 1]
    y = 1.0 / (1.0 + jnp.exp(-logit))                       # exact sigmoid
    out_ref[...] = jnp.broadcast_to(y, out_ref.shape)       # lane-dense output slab


@jax.jit
def ring_risk_forward(x, struct, w1slab, w2cat, prm):
    x64 = jnp.tile(x.reshape(1, N), (1, HEADS))             # [1, HN]
    vmem = pl.BlockSpec(memory_space=pltpu.MemorySpace.VMEM)
    out = pl.pallas_call(
        ring_risk_kernel,
        out_shape=jax.ShapeDtypeStruct((B_PAD, 128), jnp.float32),  # lane-dense output
        in_specs=[vmem] * 6,
        out_specs=vmem,
    )(x, x64, struct, w1slab, w2cat, prm)
    return out[:B, 0]   # squeeze(-1) of the [B, 1] probabilities


# ---------------- host-side packing of parameters / graph structure ----------------
def pack_params(w1_row, a1, b1, w2, a2, b2, wlin, blin):
    # Rank-1 fold of GAT1 attention coefficients: a_both = x * (w1 @ a1).
    c1 = (w1_row @ a1)[0]                                   # [2*HEADS]
    c_dst, c_src = c1[:HEADS], c1[HEADS:]

    prm = jnp.zeros((8, HC), jnp.float32)
    prm = prm.at[0, :HN].set(jnp.repeat(c_dst, N))          # c_dst[h] at lane h*N+j
    prm = prm.at[1, :HN].set(jnp.repeat(c_src, N))
    prm = prm.at[2, :].set(b1[0])
    prm = prm.at[3, :HIDDEN].set(b2[0])
    prm = prm.at[4, :HIDDEN].set(wlin[:, 0])
    prm = prm.at[5, 0].set(blin[0, 0])

    # Block-diagonal weight band + head-indicator for the single-dot attention apply.
    w1band = jnp.zeros((HN, HC), jnp.float32)
    ind64 = jnp.zeros((HN, HC), jnp.float32)
    for h in range(HEADS):
        w1band = w1band.at[h * N:(h + 1) * N, h * HIDDEN:(h + 1) * HIDDEN].set(
            jnp.broadcast_to(w1_row[0, h * HIDDEN:(h + 1) * HIDDEN], (N, HIDDEN)))
        ind64 = ind64.at[h * N:(h + 1) * N, h * HIDDEN:(h + 1) * HIDDEN].set(1.0)
    w1slab = jnp.concatenate([w1band, ind64], axis=0).astype(BF)         # [2*HN, HC]

    # Fused layer-2 weight: one dot produces [xsrc2 | xsrc2 @ a2].
    w2cat = jnp.concatenate([w2, w2 @ a2], axis=1).astype(BF)            # [HC, HIDDEN+2]
    return w1slab, w2cat, prm


def pack_struct(mask, pool):
    st = jnp.zeros((N + B_PAD, HN), jnp.float32)
    st = st.at[:N, :].set(jnp.tile(mask, (1, HEADS)))       # mask[i,j] at [i, h*N+j]
    st = st.at[N:N + B_PAD, :N].set(pool)
    return st


# ---------------- pure-JAX reference (same math, for sanity check) ----------------
def reference_forward(x_col, mask, pool, params):
    (w1_row, a1, b1, w2, a2, b2, wlin, blin) = params

    xsrc = x_col * w1_row                                   # [N, HC]
    a_both = xsrc @ a1                                      # [N, 2*HEADS]
    outs = []
    for h in range(HEADS):
        s = a_both[:, h:h + 1] + a_both[:, HEADS + h:HEADS + h + 1].T
        s = jnp.where(s > 0, s, NEG_SLOPE * s) + mask
        p = jax.nn.softmax(s, axis=-1)
        outs.append(p @ xsrc[:, h * HIDDEN:(h + 1) * HIDDEN])
    x1 = jnp.maximum(jnp.concatenate(outs, axis=-1) + b1, 0.0)

    xsrc2 = x1 @ w2
    ab2 = xsrc2 @ a2
    s2 = ab2[:, 0:1] + ab2[:, 1:2].T
    s2 = jnp.where(s2 > 0, s2, NEG_SLOPE * s2) + mask
    p2 = jax.nn.softmax(s2, axis=-1)
    x2 = jnp.maximum(p2 @ xsrc2 + b2, 0.0)

    pooled = pool @ x2
    return jax.nn.sigmoid(pooled @ wlin + blin)[:B, 0]


if __name__ == "__main__":
    key = jax.random.PRNGKey(0)
    ks = jax.random.split(key, 10)

    # ----- graph data: 2 ring graphs of 8 nodes each, node feature dim = 1 -----
    x = jax.random.normal(ks[0], (N, 1), dtype=jnp.float32)            # data.x
    src, dst = [], []
    for g in range(B):                                                  # bidirectional rings
        base = g * 8
        for i in range(8):
            a_, b_ = base + i, base + (i + 1) % 8
            src += [a_, b_]
            dst += [b_, a_]
    edge_index = jnp.array([src, dst], dtype=jnp.int32)                 # data.edge_index [2, E]
    batch = jnp.array([0] * 8 + [1] * 8, dtype=jnp.int32)               # data.batch

    # ----- glue: dense adjacency bias (with self loops), mean-pool matrix -----
    adj = jnp.zeros((N, N), jnp.float32).at[edge_index[1], edge_index[0]].set(1.0)
    adj = adj + jnp.eye(N, dtype=jnp.float32)                           # add_self_loops=True
    mask = jnp.where(adj > 0, 0.0, NEG_INF).astype(jnp.float32)
    counts = jax.ops.segment_sum(jnp.ones((N,), jnp.float32), batch, num_segments=B)
    pool = jnp.zeros((B_PAD, N), jnp.float32).at[batch, jnp.arange(N)].set(1.0 / counts[batch])

    # ----- deterministic parameter init (shapes follow the PyTorch module) -----
    def init(k, shape):
        return (0.1 * jax.random.normal(k, shape)).astype(jnp.float32)

    # GAT1: lin weight [HC, 1], att_src/att_dst [HEADS, HIDDEN], bias [HC]
    w1_t = init(ks[1], (HC, 1))
    att_src1 = init(ks[2], (HEADS, HIDDEN))
    att_dst1 = init(ks[3], (HEADS, HIDDEN))
    b1_t = init(ks[4], (HC,))
    w1_row = w1_t[:, 0].reshape(1, HC)                # in_features == 1 -> row vector
    a1 = jnp.zeros((HC, 2 * HEADS), jnp.float32)      # fused [a_dst | a_src], block-diag per head
    for h in range(HEADS):
        a1 = a1.at[h * HIDDEN:(h + 1) * HIDDEN, h].set(att_dst1[h])
        a1 = a1.at[h * HIDDEN:(h + 1) * HIDDEN, HEADS + h].set(att_src1[h])
    b1 = b1_t.reshape(1, HC)

    # GAT2: lin weight (stored transposed) [HC, HIDDEN], att [HIDDEN, 1] each, bias [HIDDEN]
    w2 = init(ks[5], (HC, HIDDEN))
    asrc2 = init(ks[6], (HIDDEN, 1))
    adst2 = init(ks[7], (HIDDEN, 1))
    a2 = jnp.concatenate([adst2, asrc2], axis=-1)     # [HIDDEN, 2]: col0 = dst, col1 = src
    b2 = init(ks[8], (HIDDEN,)).reshape(1, HIDDEN)

    # Linear(hidden, 1)
    kl1, kl2 = jax.random.split(ks[9])
    wlin = init(kl1, (HIDDEN, 1))
    blin = init(kl2, (1,)).reshape(1, 1)

    natural = (w1_row, a1, b1, w2, a2, b2, wlin, blin)
    w1slab, w2cat, prm = pack_params(*natural)        # static: packed once, outside jit
    struct = pack_struct(mask, pool)

    # ----- run kernel, verify against pure-JAX f32 reference -----
    out = ring_risk_forward(x, struct, w1slab, w2cat, prm)
    out = jax.block_until_ready(out)
    ref = reference_forward(x, mask, pool, natural)
    assert out.shape == (B,)
    # bf16 MXU operands + approx EUP reciprocals in-kernel -> compare at a looser tolerance
    assert jnp.allclose(out, ref, atol=2e-2, rtol=2e-2), (out, ref)
    print("KERNEL_OK")
</pallas_src>

<mosaic_0001>
module attributes {stable_mosaic.version = 11 : i64} {
  func.func @ring_risk_kernel(%arg0: memref<16x1xf32, #tpu.memory_space<vmem>>, %arg1: memref<1x64xf32, #tpu.memory_space<vmem>>, %arg2: memref<24x64xf32, #tpu.memory_space<vmem>>, %arg3: memref<128x128xbf16, #tpu.memory_space<vmem>>, %arg4: memref<128x34xbf16, #tpu.memory_space<vmem>>, %arg5: memref<8x128xf32, #tpu.memory_space<vmem>>, %arg6: memref<8x128xf32, #tpu.memory_space<vmem>>) attributes {dimension_semantics = [], scalar_prefetch = 0 : i64, scratch_operands = 0 : i64, tpu.core_type = #tpu.core_type<tc>} {
    %c0 = arith.constant 0 : index
    %c0_0 = arith.constant 0 : index
    %0 = vector.load %arg0[%c0, %c0_0] : memref<16x1xf32, #tpu.memory_space<vmem>>, vector<16x1xf32>
    %c0_1 = arith.constant 0 : index
    %c0_2 = arith.constant 0 : index
    %1 = vector.load %arg1[%c0_1, %c0_2] : memref<1x64xf32, #tpu.memory_space<vmem>>, vector<1x64xf32>
    %c0_3 = arith.constant 0 : index
    %c0_4 = arith.constant 0 : index
    %2 = vector.load %arg2[%c0_3, %c0_4] : memref<24x64xf32, #tpu.memory_space<vmem>>, vector<16x64xf32>
    %3 = vector.extract_strided_slice %2 {offsets = [0, 0], sizes = [16, 16], strides = [1, 1]} : vector<16x64xf32> to vector<16x16xf32>
    %c16 = arith.constant 16 : index
    %c0_5 = arith.constant 0 : index
    %4 = vector.load %arg2[%c16, %c0_5] : memref<24x64xf32, #tpu.memory_space<vmem>>, vector<8x16xf32>
    %c0_6 = arith.constant 0 : index
    %c0_7 = arith.constant 0 : index
    %5 = vector.load %arg5[%c0_6, %c0_7] : memref<8x128xf32, #tpu.memory_space<vmem>>, vector<1x64xf32>
    %c1 = arith.constant 1 : index
    %c0_8 = arith.constant 0 : index
    %6 = vector.load %arg5[%c1, %c0_8] : memref<8x128xf32, #tpu.memory_space<vmem>>, vector<1x64xf32>
    %c2 = arith.constant 2 : index
    %c0_9 = arith.constant 0 : index
    %7 = vector.load %arg5[%c2, %c0_9] : memref<8x128xf32, #tpu.memory_space<vmem>>, vector<1x128xf32>
    %c3 = arith.constant 3 : index
    %c0_10 = arith.constant 0 : index
    %8 = vector.load %arg5[%c3, %c0_10] : memref<8x128xf32, #tpu.memory_space<vmem>>, vector<1x32xf32>
    %c4 = arith.constant 4 : index
    %c0_11 = arith.constant 0 : index
    %9 = vector.load %arg5[%c4, %c0_11] : memref<8x128xf32, #tpu.memory_space<vmem>>, vector<1x32xf32>
    %c5 = arith.constant 5 : index
    %c0_12 = arith.constant 0 : index
    %10 = vector.load %arg5[%c5, %c0_12] : memref<8x128xf32, #tpu.memory_space<vmem>>, vector<1x1xf32>
    %c0_13 = arith.constant 0 : index
    %c0_14 = arith.constant 0 : index
    %11 = vector.load %arg3[%c0_13, %c0_14] : memref<128x128xbf16, #tpu.memory_space<vmem>>, vector<64x128xbf16>
    %c64 = arith.constant 64 : index
    %c0_15 = arith.constant 0 : index
    %12 = vector.load %arg3[%c64, %c0_15] : memref<128x128xbf16, #tpu.memory_space<vmem>>, vector<64x128xbf16>
    %13 = vector.broadcast %0 : vector<16x1xf32> to vector<16x64xf32>
    %14 = vector.broadcast %5 : vector<1x64xf32> to vector<16x64xf32>
    %15 = arith.mulf %13, %14 : vector<16x64xf32>
    %16 = arith.mulf %6, %1 : vector<1x64xf32>
    %17 = vector.broadcast %16 : vector<1x64xf32> to vector<16x64xf32>
    %18 = arith.addf %15, %17 : vector<16x64xf32>
    %cst = arith.constant 2.000000e-01 : f32
    %19 = vector.broadcast %cst : f32 to vector<16x64xf32>
    %20 = arith.mulf %19, %18 : vector<16x64xf32>
    %21 = arith.maximumf %18, %20 : vector<16x64xf32>
    %22 = arith.addf %21, %2 : vector<16x64xf32>
    %cst_16 = arith.constant dense<0xFF800000> : vector<16xf32>
    %23 = vector.multi_reduction <maximumf>, %22, %cst_16 [1] : vector<16x64xf32> to vector<16xf32>
    %24 = vector.shape_cast %23 : vector<16xf32> to vector<16x1xf32>
    %25 = vector.broadcast %24 : vector<16x1xf32> to vector<16x64xf32>
    %26 = arith.subf %22, %25 : vector<16x64xf32>
    %27 = math.exp %26 : vector<16x64xf32>
    %28 = vector.broadcast %1 : vector<1x64xf32> to vector<16x64xf32>
    %29 = arith.mulf %27, %28 : vector<16x64xf32>
    %30 = arith.truncf %29 : vector<16x64xf32> to vector<16x64xbf16>
    %cst_17 = arith.constant dense<0.000000e+00> : vector<16x128xf32>
    %31 = tpu.matmul %30, %11, %cst_17 {dimension_numbers = #tpu.dot_dimension_numbers<[1], [0], [0], [1], [0, 0, 1, 1], [], []>} : vector<16x64xbf16>, vector<64x128xbf16>, vector<16x128xf32> -> vector<16x128xf32>
    %32 = arith.truncf %27 : vector<16x64xf32> to vector<16x64xbf16>
    %cst_18 = arith.constant dense<0.000000e+00> : vector<16x128xf32>
    %33 = tpu.matmul %32, %12, %cst_18 {dimension_numbers = #tpu.dot_dimension_numbers<[1], [0], [0], [1], [0, 0, 1, 1], [], []>} : vector<16x64xbf16>, vector<64x128xbf16>, vector<16x128xf32> -> vector<16x128xf32>
    %34 = tpu.reciprocal %33 {approx = true} : vector<16x128xf32> -> vector<16x128xf32>
    %35 = arith.mulf %31, %34 : vector<16x128xf32>
    %36 = vector.broadcast %7 : vector<1x128xf32> to vector<16x128xf32>
    %37 = arith.addf %35, %36 : vector<16x128xf32>
    %cst_19 = arith.constant 0.000000e+00 : f32
    %38 = vector.broadcast %cst_19 : f32 to vector<16x128xf32>
    %39 = arith.maximumf %37, %38 : vector<16x128xf32>
    %40 = arith.truncf %39 : vector<16x128xf32> to vector<16x128xbf16>
    %c0_20 = arith.constant 0 : index
    %c0_21 = arith.constant 0 : index
    %41 = vector.load %arg4[%c0_20, %c0_21] : memref<128x34xbf16, #tpu.memory_space<vmem>>, vector<128x34xbf16>
    %cst_22 = arith.constant dense<0.000000e+00> : vector<16x34xf32>
    %42 = tpu.matmul %40, %41, %cst_22 {dimension_numbers = #tpu.dot_dimension_numbers<[1], [0], [0], [1], [0, 0, 1, 1], [], []>} : vector<16x128xbf16>, vector<128x34xbf16>, vector<16x34xf32> -> vector<16x34xf32>
    %43 = vector.extract_strided_slice %42 {offsets = [0, 0], sizes = [16, 32], strides = [1, 1]} : vector<16x34xf32> to vector<16x32xf32>
    %44 = vector.extract_strided_slice %42 {offsets = [0, 32], sizes = [16, 2], strides = [1, 1]} : vector<16x34xf32> to vector<16x2xf32>
    %45 = vector.extract_strided_slice %44 {offsets = [0, 0], sizes = [16, 1], strides = [1, 1]} : vector<16x2xf32> to vector<16x1xf32>
    %46 = vector.extract_strided_slice %44 {offsets = [0, 1], sizes = [16, 1], strides = [1, 1]} : vector<16x2xf32> to vector<16x1xf32>
    %47 = tpu.transpose %46, [1, 0] : vector<16x1xf32> -> vector<1x16xf32>
    %48 = vector.broadcast %45 : vector<16x1xf32> to vector<16x16xf32>
    %49 = vector.broadcast %47 : vector<1x16xf32> to vector<16x16xf32>
    %50 = arith.addf %48, %49 : vector<16x16xf32>
    %cst_23 = arith.constant 2.000000e-01 : f32
    %51 = vector.broadcast %cst_23 : f32 to vector<16x16xf32>
    %52 = arith.mulf %51, %50 : vector<16x16xf32>
    %53 = arith.maximumf %50, %52 : vector<16x16xf32>
    %54 = arith.addf %53, %3 : vector<16x16xf32>
    %cst_24 = arith.constant dense<0xFF800000> : vector<16xf32>
    %55 = vector.multi_reduction <maximumf>, %54, %cst_24 [1] : vector<16x16xf32> to vector<16xf32>
    %56 = vector.shape_cast %55 : vector<16xf32> to vector<16x1xf32>
    %57 = vector.broadcast %56 : vector<16x1xf32> to vector<16x16xf32>
    %58 = arith.subf %54, %57 : vector<16x16xf32>
    %59 = math.exp %58 : vector<16x16xf32>
    %cst_25 = arith.constant dense<0.000000e+00> : vector<16xf32>
    %60 = vector.multi_reduction <add>, %59, %cst_25 [1] : vector<16x16xf32> to vector<16xf32>
    %61 = vector.shape_cast %60 : vector<16xf32> to vector<16x1xf32>
    %62 = tpu.reciprocal %61 {approx = true} : vector<16x1xf32> -> vector<16x1xf32>
    %63 = vector.broadcast %62 : vector<16x1xf32> to vector<16x16xf32>
    %64 = arith.mulf %59, %63 : vector<16x16xf32>
    %65 = arith.truncf %64 : vector<16x16xf32> to vector<16x16xbf16>
    %66 = arith.truncf %43 : vector<16x32xf32> to vector<16x32xbf16>
    %cst_26 = arith.constant dense<0.000000e+00> : vector<16x32xf32>
    %67 = tpu.matmul %65, %66, %cst_26 {dimension_numbers = #tpu.dot_dimension_numbers<[1], [0], [0], [1], [0, 0, 1, 1], [], []>} : vector<16x16xbf16>, vector<16x32xbf16>, vector<16x32xf32> -> vector<16x32xf32>
    %68 = vector.broadcast %8 : vector<1x32xf32> to vector<16x32xf32>
    %69 = arith.addf %67, %68 : vector<16x32xf32>
    %cst_27 = arith.constant 0.000000e+00 : f32
    %70 = vector.broadcast %cst_27 : f32 to vector<16x32xf32>
    %71 = arith.maximumf %69, %70 : vector<16x32xf32>
    %72 = arith.truncf %4 : vector<8x16xf32> to vector<8x16xbf16>
    %73 = arith.truncf %71 : vector<16x32xf32> to vector<16x32xbf16>
    %cst_28 = arith.constant dense<0.000000e+00> : vector<8x32xf32>
    %74 = tpu.matmul %72, %73, %cst_28 {dimension_numbers = #tpu.dot_dimension_numbers<[1], [0], [0], [1], [0, 0, 1, 1], [], []>} : vector<8x16xbf16>, vector<16x32xbf16>, vector<8x32xf32> -> vector<8x32xf32>
    %75 = vector.broadcast %9 : vector<1x32xf32> to vector<8x32xf32>
    %76 = arith.mulf %74, %75 : vector<8x32xf32>
    %cst_29 = arith.constant dense<0.000000e+00> : vector<8xf32>
    %77 = vector.multi_reduction <add>, %76, %cst_29 [1] : vector<8x32xf32> to vector<8xf32>
    %78 = vector.shape_cast %77 : vector<8xf32> to vector<8x1xf32>
    %79 = vector.broadcast %10 : vector<1x1xf32> to vector<8x1xf32>
    %80 = arith.addf %78, %79 : vector<8x1xf32>
    %cst_30 = arith.constant 0.000000e+00 : f32
    %81 = vector.broadcast %cst_30 : f32 to vector<8x1xf32>
    %82 = arith.subf %81, %80 : vector<8x1xf32>
    %83 = math.exp %82 : vector<8x1xf32>
    %cst_31 = arith.constant 1.000000e+00 : f32
    %84 = vector.broadcast %cst_31 : f32 to vector<8x1xf32>
    %85 = arith.addf %84, %83 : vector<8x1xf32>
    %cst_32 = arith.constant 1.000000e+00 : f32
    %86 = vector.broadcast %cst_32 : f32 to vector<8x1xf32>
    %87 = arith.divf %86, %85 : vector<8x1xf32>
    %88 = vector.shape_cast %87 : vector<8x1xf32> to vector<8x1xf32>
    %89 = vector.broadcast %88 : vector<8x1xf32> to vector<8x128xf32>
    %c0_33 = arith.constant 0 : index
    %c0_34 = arith.constant 0 : index
    %90 = vector.load %arg6[%c0_33, %c0_34] : memref<8x128xf32, #tpu.memory_space<vmem>>, vector<8x128xf32>
    tpu.vector_store %arg6[%c0_33, %c0_34], %89 {strides = array<i32>} : memref<8x128xf32, #tpu.memory_space<vmem>>, vector<8x128xf32>,
    return
  }
}

</mosaic_0001>

<llo_original>
// kernel: ring_risk_forward.1
$region0: #{ring_risk_forward.1}
  #allocation0 [shape = 'u32[]', space=smem, size = 0x4, offset = 0x4, fixed_abs, tag = 'smem constant byte address 0x4 - core index']
  #allocation1 [shape = 'u32[144,128]{1,0:T(1,128)}', space=vmem, size = 0x12000, scoped, tag = 'internal scratch']
  %s0 = inlined_call_operand.vmem [shape: f32[16,1], index: 0, kind: input, shape index: {}]
  %s1 = inlined_call_operand.vmem [shape: f32[1,64], index: 1, kind: input, shape index: {}]
  %s2 = inlined_call_operand.vmem [shape: f32[24,64], index: 2, kind: input, shape index: {}]
  %s3 = inlined_call_operand.vmem [shape: bf16[128,128], index: 3, kind: input, shape index: {}]
  %s4 = inlined_call_operand.vmem [shape: bf16[128,34], index: 4, kind: input, shape index: {}]
  %s5 = inlined_call_operand.vmem [shape: f32[8,128], index: 5, kind: input, shape index: {}]
  %s6 = inlined_call_operand.vmem [shape: f32[8,128], index: 6, kind: output, shape index: {}]
  %s7 = sld [smem:[#allocation0]]
  $region34: #{ring_risk_forward.1} parent=0
    _
  %s9 = ssub.s32 1, %s7
  %s10 = scalar_select 0, %s9, %s7
  // Predicated region
  $region2: #{ring_risk_forward.1} parent=0 // pred_check
    _
  $region3: #{ring_risk_forward.1} parent=0 // pred_check_branch
    %12 = sbr.rel (0) target = $region5
  $region4: #{ring_risk_forward.1} parent=0 // pred_region
    _
  $region5: #{ring_risk_forward.1} parent=0 // pred_fallthru
    _
  // Predicated region
  $region6: #{ring_risk_forward.1} parent=0 // pred_check
    _
  $region7: #{ring_risk_forward.1} parent=0 // pred_check_branch
    %14 = sbr.rel (0) target = $region9
  $region8: #{ring_risk_forward.1} parent=0 // pred_region
    _
  $region9: #{ring_risk_forward.1} parent=0 // pred_fallthru
    _
  // Predicated region
  $region10: #{ring_risk_forward.1} parent=0 // pred_check
    _
  $region11: #{ring_risk_forward.1} parent=0 // pred_check_branch
    %16 = sbr.rel (0) target = $region13
  $region12: #{ring_risk_forward.1} parent=0 // pred_region
    _
  $region13: #{ring_risk_forward.1} parent=0 // pred_fallthru
    _
  // Predicated region
  $region14: #{ring_risk_forward.1} parent=0 // pred_check
    _
  $region15: #{ring_risk_forward.1} parent=0 // pred_check_branch
    %18 = sbr.rel (0) target = $region17
  $region16: #{ring_risk_forward.1} parent=0 // pred_region
    _
  $region17: #{ring_risk_forward.1} parent=0 // pred_fallthru
    _
  // Predicated region
  $region18: #{ring_risk_forward.1} parent=0 // pred_check
    _
  $region19: #{ring_risk_forward.1} parent=0 // pred_check_branch
    %20 = sbr.rel (0) target = $region21
  $region20: #{ring_risk_forward.1} parent=0 // pred_region
    _
  $region21: #{ring_risk_forward.1} parent=0 // pred_fallthru
    _
  // Predicated region
  $region22: #{ring_risk_forward.1} parent=0 // pred_check
    _
  $region23: #{ring_risk_forward.1} parent=0 // pred_check_branch
    %22 = sbr.rel (0) target = $region25
  $region24: #{ring_risk_forward.1} parent=0 // pred_region
    _
  $region25: #{ring_risk_forward.1} parent=0 // pred_fallthru
    _
  %v24 = vld [vmem:[%s0] sm:$0xff]
  %v25 = vld [vmem:[%s0 + $0x8] sm:$0xff]
  %v26 = vld [vmem:[%s1] sm:$0x1]
  %v27 = vld [vmem:[%s2] sm:$0xff]
  %v28 = vld [vmem:[%s2 + $0x8] sm:$0xff]
  %v29 = vld [vmem:[%s2 + $0x10] sm:$0xff]
  %v30 = vld [vmem:[%s5] sm:$0x1]
  %v31 = vld [vmem:[%s5 + $0x1] sm:$0x1]
  %v32 = vld [vmem:[%s5 + $0x2] sm:$0x1]
  %v33 = vld [vmem:[%s5 + $0x3] sm:$0x1]
  %v34 = vld [vmem:[%s5 + $0x4] sm:$0x1]
  %v35 = vld [vmem:[%s5 + $0x5] sm:$0x1]
  %v36 = vld [vmem:[%s3] sm:$0xf]
  %v37 = vld [vmem:[%s3 + $0x4] sm:$0xf]
  %v38 = vld [vmem:[%s3 + $0x8] sm:$0xf]
  %v39 = vld [vmem:[%s3 + $0xc] sm:$0xf]
  %v40 = vld [vmem:[%s3 + $0x10] sm:$0xf]
  %v41 = vld [vmem:[%s3 + $0x14] sm:$0xf]
  %v42 = vld [vmem:[%s3 + $0x18] sm:$0xf]
  %v43 = vld [vmem:[%s3 + $0x1c] sm:$0xf]
  %v44 = vld [vmem:[%s3 + $0x20] sm:$0xf]
  %v45 = vld [vmem:[%s3 + $0x24] sm:$0xf]
  %v46 = vld [vmem:[%s3 + $0x28] sm:$0xf]
  %v47 = vld [vmem:[%s3 + $0x2c] sm:$0xf]
  %v48 = vld [vmem:[%s3 + $0x30] sm:$0xf]
  %v49 = vld [vmem:[%s3 + $0x34] sm:$0xf]
  %v50 = vld [vmem:[%s3 + $0x38] sm:$0xf]
  %v51 = vld [vmem:[%s3 + $0x3c] sm:$0xf]
  %53 = vset.pattern.permute.xlu0 0
  %54 = vperm.xlu0 %53, %v24
  %v55 = vpop.permute.xlu0 %54
  %58 = vset.pattern.permute.xlu0 0
  %59 = vperm.xlu0 %58, %v25
  %v60 = vpop.permute.xlu0 %59
  %v62 = vlaneseq
  %v63 = vshrl.u32 %v62, 7
  %v64 = vsub.s32 0, %v63
  %v65 = vrot.slane %v30, %v64
  %v66 = vmul.f32 %v55, %v65
  %v67 = vmul.f32 %v60, %v65
  %v68 = vmul.f32 %v31, %v26
  %v69 = vlaneseq
  %v70 = vshrl.u32 %v69, 7
  %v71 = vsub.s32 0, %v70
  %v72 = vrot.slane %v68, %v71
  %v73 = vadd.f32 %v66, %v72
  %v74 = vadd.f32 %v67, %v72
  %v75 = vmul.f32 %v73, 0.2
  %v76 = vmul.f32 %v74, 0.2
  %v77 = vmax.f32 %v73, %v75
  %v78 = vmax.f32 %v74, %v76
  %v79 = vadd.f32 %v77, %v27
  %v80 = vadd.f32 %v78, %v28
  %vm81 = vcmask 523264
  %v82 = vsel %vm81, %v79, -inf
  %83 = vmax.xlane.f32.xlu0 %v82
  %v84 = vpop.xlane.xlu0 %83
  %v85 = vsel %vm81, %v80, -inf
  %86 = vmax.xlane.f32.xlu0 %v85
  %v87 = vpop.xlane.xlu0 %86
  %v88 = vsub.f32 %v79, %v84
  %v89 = vsub.f32 %v80, %v87
  %v90 = vmul.f32 %v88, 1.442695
  %v91 = vpow.pop %v90
  %v92 = vmul.f32 %v89, 1.442695
  %v93 = vpow.pop %v92
  %v95 = vlaneseq
  %v96 = vshrl.u32 %v95, 7
  %v97 = vsub.s32 0, %v96
  %v98 = vrot.slane %v26, %v97
  %v100 = vmul.f32 %v91, %v98
  %v101 = vmul.f32 %v93, %v98
  %v102 = vpack.c.bf16 %v101, %v100
  %v111 = vunpack.c.l.b16 %v36
  %v112 = vunpack.c.l.b16 %v37
  %v113 = vunpack.c.l.b16 %v38
  %v114 = vunpack.c.l.b16 %v39
  %v115 = vunpack.c.l.b16 %v40
  %v116 = vunpack.c.l.b16 %v41
  %v117 = vunpack.c.l.b16 %v42
  %v118 = vunpack.c.l.b16 %v43
  %v119 = vpack.c.b16 %v112, %v111
  %v120 = vpack.c.b16 %v114, %v113
  %v121 = vpack.c.b16 %v116, %v115
  %v122 = vpack.c.b16 %v118, %v117
  %v128 = vsel %vm81, %v102, 0
  %130 = vmatprep.subr.bf16.mxu0 0
  %131 = vmatpush1.bf16.msra.mxu0 0
  %132 = vmatprep.subr.bf16.mxu0 0
  %133 = vmatpush1.bf16.msra.mxu0 0
  %134 = vmatprep.subr.bf16.mxu0 0
  %135 = vmatpush1.bf16.msra.mxu0 0
  %136 = vmatprep.subr.bf16.mxu0 0
  %137 = vmatpush1.bf16.msra.mxu0 0
  %138 = vmatprep.subr.bf16.mxu0 0
  %139 = vmatpush1.bf16.msra.mxu0 %v122
  %140 = vmatprep.subr.bf16.mxu0 0
  %141 = vmatpush1.bf16.msra.mxu0 %v121
  %142 = vmatprep.subr.bf16.mxu0 0
  %143 = vmatpush1.bf16.msra.mxu0 %v120
  %144 = vmatprep.subr.bf16.mxu0 0
  %145 = vmatpush1.bf16.msra.mxu0 %v119
  %146 = vmatprep.subr.bf16.mxu0 0
  %147 = vmatpush2.bf16.msra.mxu0 0
  %148 = vmatprep.subr.bf16.mxu0 0
  %149 = vmatpush2.bf16.msra.mxu0 0
  %150 = vmatprep.subr.bf16.mxu0 0
  %151 = vmatpush2.bf16.msra.mxu0 0
  %152 = vmatprep.subr.bf16.mxu0 0
  %153 = vmatpush2.bf16.msra.mxu0 0
  %154 = vmatprep.subr.bf16.mxu0 0
  %155 = vmatpush2.bf16.msra.mxu0 0
  %156 = vmatprep.subr.bf16.mxu0 0
  %157 = vmatpush2.bf16.msra.mxu0 0
  %158 = vmatprep.subr.bf16.mxu0 0
  %159 = vmatpush2.bf16.msra.mxu0 0
  %160 = vmatprep.subr.bf16.mxu0 0
  %161 = vmatpush2.bf16.msra.mxu0 0
  %162 = vmatprep.mubr.bf16.mxu0 0
  %163 = vmatmul.mubr.bf16.gmra.mxu0 %v128
  %v164 = vpop.f32.mrf.mxu0
  %v165 = vadd.f32 0.0, %v164
  %v166 = vpop.f32.mrf.mxu0
  %v167 = vpop.f32.mrf.mxu0
  %v168 = vadd.f32 0.0, %v167
  %v169 = vpop.f32.mrf.mxu0
  %170 = vdwg.mxu0
  %v171 = vpack.c.bf16 %v93, %v91
  %v180 = vunpack.c.l.b16 %v44
  %v181 = vunpack.c.l.b16 %v45
  %v182 = vunpack.c.l.b16 %v46
  %v183 = vunpack.c.l.b16 %v47
  %v184 = vunpack.c.l.b16 %v48
  %v185 = vunpack.c.l.b16 %v49
  %v186 = vunpack.c.l.b16 %v50
  %v187 = vunpack.c.l.b16 %v51
  %v188 = vpack.c.b16 %v181, %v180
  %v189 = vpack.c.b16 %v183, %v182
  %v190 = vpack.c.b16 %v185, %v184
  %v191 = vpack.c.b16 %v187, %v186
  %v197 = vsel %vm81, %v171, 0
  %199 = vmatprep.subr.bf16.mxu0 0
  %200 = vmatpush1.bf16.msra.mxu0 0
  %201 = vmatprep.subr.bf16.mxu0 0
  %202 = vmatpush1.bf16.msra.mxu0 0
  %203 = vmatprep.subr.bf16.mxu0 0
  %204 = vmatpush1.bf16.msra.mxu0 0
  %205 = vmatprep.subr.bf16.mxu0 0
  %206 = vmatpush1.bf16.msra.mxu0 0
  %207 = vmatprep.subr.bf16.mxu0 0
  %208 = vmatpush1.bf16.msra.mxu0 %v191
  %209 = vmatprep.subr.bf16.mxu0 0
  %210 = vmatpush1.bf16.msra.mxu0 %v190
  %211 = vmatprep.subr.bf16.mxu0 0
  %212 = vmatpush1.bf16.msra.mxu0 %v189
  %213 = vmatprep.subr.bf16.mxu0 0
  %214 = vmatpush1.bf16.msra.mxu0 %v188
  %215 = vmatprep.subr.bf16.mxu0 0
  %216 = vmatpush2.bf16.msra.mxu0 0
  %217 = vmatprep.subr.bf16.mxu0 0
  %218 = vmatpush2.bf16.msra.mxu0 0
  %219 = vmatprep.subr.bf16.mxu0 0
  %220 = vmatpush2.bf16.msra.mxu0 0
  %221 = vmatprep.subr.bf16.mxu0 0
  %222 = vmatpush2.bf16.msra.mxu0 0
  %223 = vmatprep.subr.bf16.mxu0 0
  %224 = vmatpush2.bf16.msra.mxu0 0
  %225 = vmatprep.subr.bf16.mxu0 0
  %226 = vmatpush2.bf16.msra.mxu0 0
  %227 = vmatprep.subr.bf16.mxu0 0
  %228 = vmatpush2.bf16.msra.mxu0 0
  %229 = vmatprep.subr.bf16.mxu0 0
  %230 = vmatpush2.bf16.msra.mxu0 0
  %231 = vmatprep.mubr.bf16.mxu0 0
  %232 = vmatmul.mubr.bf16.gmra.mxu0 %v197
  %v233 = vpop.f32.mrf.mxu0
  %v234 = vadd.f32 0.0, %v233
  %v235 = vpop.f32.mrf.mxu0
  %v236 = vpop.f32.mrf.mxu0
  %v237 = vadd.f32 0.0, %v236
  %v238 = vpop.f32.mrf.mxu0
  %239 = vdwg.mxu0
  %v240 = vrcp.pop %v234
  %v241 = vrcp.pop %v237
  %v242 = vmul.f32 %v165, %v240
  %v243 = vmul.f32 %v168, %v241
  %v244 = vlaneseq
  %v245 = vshrl.u32 %v244, 7
  %v246 = vsub.s32 0, %v245
  %v247 = vrot.slane %v32, %v246
  %v248 = vadd.f32 %v242, %v247
  %v249 = vadd.f32 %v243, %v247
  %v250 = vmax.f32 %v248, 0.0
  %v251 = vmax.f32 %v249, 0.0
  %v252 = vpack.c.bf16 %v251, %v250
  %v253 = vld [vmem:[%s4] sm:$0xf]
  %v254 = vld [vmem:[%s4 + $0x4] sm:$0xf]
  %v255 = vld [vmem:[%s4 + $0x8] sm:$0xf]
  %v256 = vld [vmem:[%s4 + $0xc] sm:$0xf]
  %v257 = vld [vmem:[%s4 + $0x10] sm:$0xf]
  %v258 = vld [vmem:[%s4 + $0x14] sm:$0xf]
  %v259 = vld [vmem:[%s4 + $0x18] sm:$0xf]
  %v260 = vld [vmem:[%s4 + $0x1c] sm:$0xf]
  %v261 = vld [vmem:[%s4 + $0x20] sm:$0xf]
  %v262 = vld [vmem:[%s4 + $0x24] sm:$0xf]
  %v263 = vld [vmem:[%s4 + $0x28] sm:$0xf]
  %v264 = vld [vmem:[%s4 + $0x2c] sm:$0xf]
  %v265 = vld [vmem:[%s4 + $0x30] sm:$0xf]
  %v266 = vld [vmem:[%s4 + $0x34] sm:$0xf]
  %v267 = vld [vmem:[%s4 + $0x38] sm:$0xf]
  %v268 = vld [vmem:[%s4 + $0x3c] sm:$0xf]
  %v285 = vunpack.c.l.b16 %v253
  %v286 = vunpack.c.l.b16 %v254
  %v287 = vunpack.c.l.b16 %v255
  %v288 = vunpack.c.l.b16 %v256
  %v289 = vunpack.c.l.b16 %v257
  %v290 = vunpack.c.l.b16 %v258
  %v291 = vunpack.c.l.b16 %v259
  %v292 = vunpack.c.l.b16 %v260
  %v293 = vunpack.c.l.b16 %v261
  %v294 = vunpack.c.l.b16 %v262
  %v295 = vunpack.c.l.b16 %v263
  %v296 = vunpack.c.l.b16 %v264
  %v297 = vunpack.c.l.b16 %v265
  %v298 = vunpack.c.l.b16 %v266
  %v299 = vunpack.c.l.b16 %v267
  %v300 = vunpack.c.l.b16 %v268
  %v301 = vpack.c.b16 %v286, %v285
  %v302 = vpack.c.b16 %v288, %v287
  %v303 = vpack.c.b16 %v290, %v289
  %v304 = vpack.c.b16 %v292, %v291
  %v305 = vpack.c.b16 %v294, %v293
  %v306 = vpack.c.b16 %v296, %v295
  %v307 = vpack.c.b16 %v298, %v297
  %v308 = vpack.c.b16 %v300, %v299
  %317 = vmatprep.subr.bf16.mxu0 0
  %318 = vmatpush1.bf16.msra.mxu0 %v308
  %319 = vmatprep.subr.bf16.mxu0 0
  %320 = vmatpush1.bf16.msra.mxu0 %v307
  %321 = vmatprep.subr.bf16.mxu0 0
  %322 = vmatpush1.bf16.msra.mxu0 %v306
  %323 = vmatprep.subr.bf16.mxu0 0
  %324 = vmatpush1.bf16.msra.mxu0 %v305
  %325 = vmatprep.subr.bf16.mxu0 0
  %326 = vmatpush1.bf16.msra.mxu0 %v304
  %327 = vmatprep.subr.bf16.mxu0 0
  %328 = vmatpush1.bf16.msra.mxu0 %v303
  %329 = vmatprep.subr.bf16.mxu0 0
  %330 = vmatpush1.bf16.msra.mxu0 %v302
  %331 = vmatprep.subr.bf16.mxu0 0
  %332 = vmatpush1.bf16.msra.mxu0 %v301
  %333 = vmatprep.subr.bf16.mxu0 0
  %334 = vmatpush2.bf16.msra.mxu0 0
  %335 = vmatprep.subr.bf16.mxu0 0
  %336 = vmatpush2.bf16.msra.mxu0 0
  %337 = vmatprep.subr.bf16.mxu0 0
  %338 = vmatpush2.bf16.msra.mxu0 0
  %339 = vmatprep.subr.bf16.mxu0 0
  %340 = vmatpush2.bf16.msra.mxu0 0
  %341 = vmatprep.subr.bf16.mxu0 0
  %342 = vmatpush2.bf16.msra.mxu0 0
  %343 = vmatprep.subr.bf16.mxu0 0
  %344 = vmatpush2.bf16.msra.mxu0 0
  %345 = vmatprep.subr.bf16.mxu0 0
  %346 = vmatpush2.bf16.msra.mxu0 0
  %347 = vmatprep.subr.bf16.mxu0 0
  %348 = vmatpush2.bf16.msra.mxu0 0
  %349 = vmatprep.mubr.bf16.mxu0 0
  %350 = vmatmul.mubr.bf16.gmra.mxu0 %v252
  %v351 = vpop.f32.mrf.mxu0
  %v352 = vadd.f32 0.0, %v351
  %v353 = vpop.f32.mrf.mxu0
  %v354 = vpop.f32.mrf.mxu0
  %v355 = vadd.f32 0.0, %v354
  %v356 = vpop.f32.mrf.mxu0
  %357 = vdwg.mxu0
  %360 = vrot.lane.b32.xlu0 %v352, 95
  %v361 = vpop.permute.xlu0 %360
  %362 = vrot.lane.b32.xlu0 %v355, 95
  %v363 = vpop.permute.xlu0 %362
  %366 = vxpose.xlu0.b32.start [1/16] %v361, 128
  %367 = vxpose.xlu0.b32.cont [2/16] %v363, 128
  %368 = vxpose.xlu0.b32.cont [3/16] 0.0, 128
  %369 = vxpose.xlu0.b32.cont [4/16] 0.0, 128
  %370 = vxpose.xlu0.b32.cont [5/16] 0.0, 128
  %371 = vxpose.xlu0.b32.cont [6/16] 0.0, 128
  %372 = vxpose.xlu0.b32.cont [7/16] 0.0, 128
  %373 = vxpose.xlu0.b32.cont [8/16] 0.0, 128
  %374 = vxpose.xlu0.b32.cont [9/16] 0.0, 128
  %375 = vxpose.xlu0.b32.cont [10/16] 0.0, 128
  %376 = vxpose.xlu0.b32.cont [11/16] 0.0, 128
  %377 = vxpose.xlu0.b32.cont [12/16] 0.0, 128
  %378 = vxpose.xlu0.b32.cont [13/16] 0.0, 128
  %379 = vxpose.xlu0.b32.cont [14/16] 0.0, 128
  %380 = vxpose.xlu0.b32.cont [15/16] 0.0, 128
  %381 = vxpose.xlu0.b32.end [16/16] 0.0, 128
  %v382 = vpop.trf.xlu0
  %v383 = vpop.trf.xlu0
  %v384 = vpop.trf.xlu0
  %v385 = vpop.trf.xlu0
  %v386 = vpop.trf.xlu0
  %v387 = vpop.trf.xlu0
  %v388 = vpop.trf.xlu0
  %v389 = vpop.trf.xlu0
  %v390 = vpop.trf.xlu0
  %v391 = vpop.trf.xlu0
  %v392 = vpop.trf.xlu0
  %v393 = vpop.trf.xlu0
  %v394 = vpop.trf.xlu0
  %v395 = vpop.trf.xlu0
  %v396 = vpop.trf.xlu0
  %v397 = vpop.trf.xlu0
  %398 = vset.pattern.permute.xlu0 32
  %399 = vperm.xlu0 %398, %v352
  %v400 = vpop.permute.xlu0 %399
  %402 = vset.pattern.permute.xlu0 32
  %403 = vperm.xlu0 %402, %v355
  %v404 = vpop.permute.xlu0 %403
  %v406 = vlaneseq
  %v407 = vshrl.u32 %v406, 7
  %v408 = vsub.s32 0, %v407
  %v409 = vrot.slane %v382, %v408
  %v410 = vadd.f32 %v400, %v409
  %v411 = vadd.f32 %v404, %v409
  %v412 = vmul.f32 %v410, 0.2
  %v413 = vmul.f32 %v411, 0.2
  %v414 = vmax.f32 %v410, %v412
  %v415 = vmax.f32 %v411, %v413
  %v416 = vadd.f32 %v414, %v27
  %v417 = vadd.f32 %v415, %v28
  %vm418 = vcmask 130048
  %v419 = vsel %vm418, %v416, -inf
  %420 = vmax.xlane.f32.xlu0 %v419
  %v421 = vpop.xlane.xlu0 %420
  %v422 = vsel %vm418, %v417, -inf
  %423 = vmax.xlane.f32.xlu0 %v422
  %v424 = vpop.xlane.xlu0 %423
  %v425 = vsub.f32 %v416, %v421
  %v426 = vsub.f32 %v417, %v424
  %v427 = vmul.f32 %v425, 1.442695
  %v428 = vpow.pop %v427
  %v429 = vmul.f32 %v426, 1.442695
  %v430 = vpow.pop %v429
  %v431 = vsel %vm418, %v428, 0.0
  %432 = vadd.xlane.f32.xlu0 %v431
  %v433 = vpop.xlane.xlu0 %432
  %v434 = vsel %vm418, %v430, 0.0
  %435 = vadd.xlane.f32.xlu0 %v434
  %v436 = vpop.xlane.xlu0 %435
  %v437 = vrcp.pop %v433
  %v438 = vrcp.pop %v436
  %v439 = vmul.f32 %v428, %v437
  %v440 = vmul.f32 %v430, %v438
  %v441 = vpack.c.bf16 %v440, %v439
  %v442 = vpack.c.bf16 %v355, %v352
  %v443 = vlaneseq
  %v444 = vshrl.u32 %v443, 7
  %v445 = vsub.s32 0, %v444
  %v446 = vrot.slane %v33, %v445
  %v448 = vsel %vm418, %v441, 0
  %450 = vmatprep.subr.bf16.mxu0 0
  %451 = vmatpush1.bf16.msra.mxu0 0
  %452 = vmatprep.subr.bf16.mxu0 0
  %453 = vmatpush1.bf16.msra.mxu0 0
  %454 = vmatprep.subr.bf16.mxu0 0
  %455 = vmatpush1.bf16.msra.mxu0 0
  %456 = vmatprep.subr.bf16.mxu0 0
  %457 = vmatpush1.bf16.msra.mxu0 0
  %458 = vmatprep.subr.bf16.mxu0 0
  %459 = vmatpush1.bf16.msra.mxu0 0
  %460 = vmatprep.subr.bf16.mxu0 0
  %461 = vmatpush1.bf16.msra.mxu0 0
  %462 = vmatprep.subr.bf16.mxu0 0
  %463 = vmatpush1.bf16.msra.mxu0 0
  %464 = vmatprep.subr.bf16.mxu0 0
  %465 = vmatpush1.bf16.msra.mxu0 %v442
  %466 = vmatprep.subr.bf16.mxu0 0
  %467 = vmatpush2.bf16.msra.mxu0 0
  %468 = vmatprep.subr.bf16.mxu0 0
  %469 = vmatpush2.bf16.msra.mxu0 0
  %470 = vmatprep.subr.bf16.mxu0 0
  %471 = vmatpush2.bf16.msra.mxu0 0
  %472 = vmatprep.subr.bf16.mxu0 0
  %473 = vmatpush2.bf16.msra.mxu0 0
  %474 = vmatprep.subr.bf16.mxu0 0
  %475 = vmatpush2.bf16.msra.mxu0 0
  %476 = vmatprep.subr.bf16.mxu0 0
  %477 = vmatpush2.bf16.msra.mxu0 0
  %478 = vmatprep.subr.bf16.mxu0 0
  %479 = vmatpush2.bf16.msra.mxu0 0
  %480 = vmatprep.subr.bf16.mxu0 0
  %481 = vmatpush2.bf16.msra.mxu0 0
  %482 = vmatprep.mubr.bf16.mxu0 0
  %483 = vmatmul.mubr.bf16.gmra.mxu0 %v448
  %v484 = vpop.f32.mrf.mxu0
  %v485 = vadd.f32 %v446, %v484
  %v486 = vpop.f32.mrf.mxu0
  %v487 = vpop.f32.mrf.mxu0
  %v488 = vadd.f32 %v446, %v487
  %v489 = vpop.f32.mrf.mxu0
  %490 = vdwg.mxu0
  %v491 = vmax.f32 %v485, 0.0
  %v492 = vmax.f32 %v488, 0.0
  %v493 = vpack.c.bf16 %v29, %v29
  %v494 = vpack.c.bf16 %v492, %v491
  %v496 = vsel %vm418, %v493, 0
  %498 = vmatprep.subr.bf16.mxu0 0
  %499 = vmatpush1.bf16.msra.mxu0 0
  %500 = vmatprep.subr.bf16.mxu0 0
  %501 = vmatpush1.bf16.msra.mxu0 0
  %502 = vmatprep.subr.bf16.mxu0 0
  %503 = vmatpush1.bf16.msra.mxu0 0
  %504 = vmatprep.subr.bf16.mxu0 0
  %505 = vmatpush1.bf16.msra.mxu0 0
  %506 = vmatprep.subr.bf16.mxu0 0
  %507 = vmatpush1.bf16.msra.mxu0 0
  %508 = vmatprep.subr.bf16.mxu0 0
  %509 = vmatpush1.bf16.msra.mxu0 0
  %510 = vmatprep.subr.bf16.mxu0 0
  %511 = vmatpush1.bf16.msra.mxu0 0
  %512 = vmatprep.subr.bf16.mxu0 0
  %513 = vmatpush1.bf16.msra.mxu0 %v494
  %514 = vmatprep.subr.bf16.mxu0 0
  %515 = vmatpush2.bf16.msra.mxu0 0
  %516 = vmatprep.subr.bf16.mxu0 0
  %517 = vmatpush2.bf16.msra.mxu0 0
  %518 = vmatprep.subr.bf16.mxu0 0
  %519 = vmatpush2.bf16.msra.mxu0 0
  %520 = vmatprep.subr.bf16.mxu0 0
  %521 = vmatpush2.bf16.msra.mxu0 0
  %522 = vmatprep.subr.bf16.mxu0 0
  %523 = vmatpush2.bf16.msra.mxu0 0
  %524 = vmatprep.subr.bf16.mxu0 0
  %525 = vmatpush2.bf16.msra.mxu0 0
  %526 = vmatprep.subr.bf16.mxu0 0
  %527 = vmatpush2.bf16.msra.mxu0 0
  %528 = vmatprep.subr.bf16.mxu0 0
  %529 = vmatpush2.bf16.msra.mxu0 0
  %530 = vmatprep.mubr.bf16.mxu0 0
  %531 = vmatmul.mubr.bf16.gmra.mxu0 %v496
  %v532 = vpop.f32.mrf.mxu0
  %v533 = vadd.f32 0.0, %v532
  %v534 = vpop.f32.mrf.mxu0
  %v535 = vpop.f32.mrf.mxu0
  %v536 = vpop.f32.mrf.mxu0
  %537 = vdwg.mxu0
  %v538 = vlaneseq
  %v539 = vshrl.u32 %v538, 7
  %v540 = vsub.s32 0, %v539
  %v541 = vrot.slane %v34, %v540
  %v542 = vmul.f32 %v533, %v541
  %vm543 = vcmask 261120
  %v544 = vsel %vm543, %v542, 0.0
  %545 = vadd.xlane.f32.xlu0 %v544
  %v546 = vpop.xlane.xlu0 %545
  %v547 = vlaneseq
  %v548 = vshrl.u32 %v547, 7
  %v549 = vsub.s32 0, %v548
  %v550 = vrot.slane %v35, %v549
  %v551 = vadd.f32 %v546, %v550
  %v552 = vsub.f32 0.0, %v551
  %v553 = vmul.f32 %v552, 1.442695
  %v554 = vpow.pop %v553
  %v555 = vadd.f32 %v554, 1.0
  %v556 = vrcp.pop %v555
  %v557 = vmul.f32 1.0, %v556
  %559 = vset.pattern.permute.xlu0 0
  %560 = vperm.xlu0 %559, %v557
  %v561 = vpop.permute.xlu0 %560
  %563 = vst [vmem:[%s6] sm:$0xff] %v561
  // Predicated region
  $region26: #{ring_risk_forward.1} parent=0 // pred_check
    _
  $region27: #{ring_risk_forward.1} parent=0 // pred_check_branch
    %565 = sbr.rel (0) target = $region29
  $region28: #{ring_risk_forward.1} parent=0 // pred_region
    _
  $region29: #{ring_risk_forward.1} parent=0 // pred_fallthru
    _
  // Predicated region
  $region30: #{ring_risk_forward.1} parent=0 // pred_check
    _
  $region31: #{ring_risk_forward.1} parent=0 // pred_check_branch
    %567 = sbr.rel (0) target = $region33
  $region32: #{ring_risk_forward.1} parent=0 // pred_region
    _
  $region33: #{ring_risk_forward.1} parent=0 // pred_fallthru
    _

</llo_original>
